<compile_context>
chip_gen: v6e
topology: v6e:2x2x1
jax: 0.10.0
libtpu: 0.0.40
codegen_flags: <defaults>
</compile_context>

<pallas_src>
import jax
import jax.numpy as jnp
from jax.experimental import pallas as pl
from jax.experimental.pallas import tpu as pltpu

HID = 32
TB_MAX = 4096  # batch-tile (lane) width cap; multiple of 128, v7x-VMEM-safe


def _cdiv(a, b):
    return -(-a // b)


def _round_up(x, m):
    return _cdiv(x, m) * m


def realnvp_kernel(z_ref, vecs_ref, w2t_ref, w3t_ref, out_ref):
    """One batch tile.

    z_ref:    (2, TB) f32      — batch on lanes.
    vecs_ref: (2, 64, 4) f32   — per pair: [W1 | B1 | B2 | B3(padded)] columns.
    w2t_ref:  (2, 64, 64) bf16 — block-diag pre-transposed layer-2 weights.
    w3t_ref:  (2, 2, 64) f32   — block-diag pre-transposed layer-3 weights.
    out_ref:  (3, TB) f32      — rows [z1', z2', log_det].
    """
    z1 = z_ref[0:1, :]                         # (1, TB)
    z2 = z_ref[1:2, :]                         # (1, TB)

    def fused_pair(x, p):
        # x: (1, TB).  Pair p fuses two MLPs sharing the same input.
        v = vecs_ref[p]                        # (64, 4) f32, VMEM-resident
        w1 = v[:, 0:1]                         # (64, 1)
        b1 = v[:, 1:2]
        b2 = v[:, 2:3]
        b3 = v[0:2, 3:4]                       # (2, 1)
        # Layer 1: Linear(1, 64) -> ReLU. in_dim == 1 -> pure VPU broadcast (f32).
        h = jnp.maximum(w1 * x + b1, 0.0)                              # (64, TB)
        # Layer 2: block-diag Linear(64, 64) -> ReLU on the MXU.
        # bf16 operands, f32 accumulation (cuts vmatmul passes ~3x vs f32xf32).
        h = jnp.maximum(
            jnp.dot(w2t_ref[p], h.astype(jnp.bfloat16),
                    preferred_element_type=jnp.float32) + b2, 0.0)     # (64, TB)
        # Layer 3: block-diag Linear(64, 2) in f32 (feeds exp(), keep accurate).
        return (jnp.dot(w3t_ref[p], h, preferred_element_type=jnp.float32)
                + b3)                                                  # (2, TB)

    out_a = fused_pair(z1, 0)                  # row 0: mlp1(z1), row 1: mlp2(z1)
    t1 = out_a[0:1, :]
    z2n = z2 * jnp.exp(t1) + out_a[1:2, :]

    out_b = fused_pair(z2n, 1)                 # row 0: mlp3(z2'), row 1: mlp4(z2')
    t2 = out_b[0:1, :]
    z1n = z1 * jnp.exp(t2) + out_b[1:2, :]

    # Single merged lane-dense output stream: [z1', z2', log_det].
    out_ref[0:1, :] = z1n
    out_ref[1:2, :] = z2n
    out_ref[2:3, :] = t1 + t2


def init_params(key, n_mlps=4, in_dim=1, hid=HID, out_dim=1):
    """PyTorch-style uniform init; raw per-MLP weights stacked over the 4 MLPs."""
    keys = jax.random.split(key, n_mlps * 6)

    def u(k, shape, fan_in):
        bound = 1.0 / jnp.sqrt(float(fan_in))
        return jax.random.uniform(k, shape, jnp.float32, -bound, bound)

    w1 = jnp.stack([u(keys[6 * i + 0], (in_dim, hid), in_dim) for i in range(n_mlps)])   # (4,1,32)
    b1 = jnp.stack([u(keys[6 * i + 1], (hid,), in_dim) for i in range(n_mlps)])          # (4,32)
    w2 = jnp.stack([u(keys[6 * i + 2], (hid, hid), hid) for i in range(n_mlps)])         # (4,32,32)
    b2 = jnp.stack([u(keys[6 * i + 3], (hid,), hid) for i in range(n_mlps)])             # (4,32)
    w3 = jnp.stack([u(keys[6 * i + 4], (hid, out_dim), hid) for i in range(n_mlps)])     # (4,32,1)
    b3 = jnp.stack([u(keys[6 * i + 5], (out_dim,), hid) for i in range(n_mlps)])         # (4,1)
    return w1, b1, w2, b2, w3, b3


def fuse_params(params, hid=HID):
    """Fuse (mlp1,mlp2) and (mlp3,mlp4) into block-diagonal, pre-transposed
    weights for the batch-on-lane kernel, packed into 3 arrays.  Built once."""
    w1, b1, w2, b2, w3, b3 = params

    def pair(a, b):
        W1 = jnp.concatenate([w1[a], w1[b]], axis=1).reshape(2 * hid)   # (64,)
        B1 = jnp.concatenate([b1[a], b1[b]])                            # (64,)
        W2T = jax.scipy.linalg.block_diag(w2[a].T, w2[b].T)             # (64,64)
        B2 = jnp.concatenate([b2[a], b2[b]])                            # (64,)
        W3T = jax.scipy.linalg.block_diag(w3[a].T, w3[b].T)             # (2,64)
        B3 = jnp.concatenate([b3[a], b3[b]])                            # (2,)
        B3p = jnp.zeros((2 * hid,), jnp.float32).at[:2].set(B3)         # (64,)
        vec = jnp.stack([W1, B1, B2, B3p], axis=1)                      # (64,4)
        return vec, W2T, W3T

    va, w2a, w3a = pair(0, 1)   # consumes z1
    vb, w2b, w3b = pair(2, 3)   # consumes updated z2
    vecs = jnp.stack([va, vb]).astype(jnp.float32)        # (2,64,4)   f32
    w2t = jnp.stack([w2a, w2b]).astype(jnp.bfloat16)      # (2,64,64)  bf16 (MXU operand)
    w3t = jnp.stack([w3a, w3b]).astype(jnp.float32)       # (2,2,64)   f32
    return vecs, w2t, w3t


def _realnvp_core(zT, fused):
    """Channel-major core: zT is (2, B) f32. Returns ((2, B) z_out, (B,) log_det)."""
    vecs, w2t, w3t = fused
    zT = zT.astype(jnp.float32)
    B = zT.shape[1]

    # Tile plan: near-equal tiles, >= 2 grid steps when B > 128 (v7x megacore),
    # pad waste <= one 128-lane group per tile, TB <= TB_MAX.
    n_tiles = max(_cdiv(B, TB_MAX), 2 if B > 128 else 1)
    TB = _round_up(_cdiv(B, n_tiles), 128)
    Bp = TB * n_tiles

    zTp = zT if Bp == B else jnp.pad(zT, ((0, 0), (0, Bp - B)))

    const3 = lambda i: (0, 0, 0)
    outT = pl.pallas_call(
        realnvp_kernel,
        out_shape=jax.ShapeDtypeStruct((3, Bp), jnp.float32),
        grid=(n_tiles,),
        in_specs=[
            pl.BlockSpec((2, TB), lambda i: (0, i)),     # z tile (streamed)
            pl.BlockSpec(vecs.shape, const3),            # packed weights: VMEM-resident
            pl.BlockSpec(w2t.shape, const3),
            pl.BlockSpec(w3t.shape, const3),
        ],
        out_specs=pl.BlockSpec((3, TB), lambda i: (0, i)),
        compiler_params=pltpu.CompilerParams(
            dimension_semantics=("parallel",),           # megacore-shardable on v7x
            vmem_limit_bytes=32 * 1024 * 1024),
    )(zTp, vecs, w2t, w3t)

    return outT[0:2, :B], outT[2, :B]


# Channel-major API (no transposes anywhere): zT (2, B) -> ((2, B), (B,)).
realnvp_forward_cm = jax.jit(_realnvp_core)


@jax.jit
def realnvp_forward(z, fused):
    """PyTorch-compatible API: z (B, 2) -> (z_out (B, 2), log_det (B,))."""
    z_outT, log_det = _realnvp_core(z.astype(jnp.float32).T, fused)
    return z_outT.T, log_det


def realnvp_reference(z, params):
    """Pure-JAX reference mirroring the PyTorch forward exactly (raw f32 params)."""
    w1, b1, w2, b2, w3, b3 = params

    def mlp(x, k):
        h = jnp.maximum(x @ w1[k] + b1[k], 0.0)
        h = jnp.maximum(h @ w2[k] + b2[k], 0.0)
        return h @ w3[k] + b3[k]

    z1, z2 = z[:, 0:1], z[:, 1:2]
    t1 = mlp(z1, 0)
    z2 = z2 * jnp.exp(t1) + mlp(z1, 1)
    t2 = mlp(z2, 2)
    z1 = z1 * jnp.exp(t2) + mlp(z2, 3)
    return jnp.concatenate([z1, z2], axis=1), (t1 + t2).reshape(-1)


if __name__ == "__main__":
    key = jax.random.PRNGKey(0)
    kp, kz1, kz2 = jax.random.split(key, 3)
    params = init_params(kp)
    fused = fuse_params(params)

    # Tolerances: layer-2 matmul uses bf16 MXU operands (f32 accumulation), so
    # results match the f32 reference to ~1e-2 rel rather than 1e-4.
    ATOL = RTOL = 2e-2

    # Small batch: single 128-wide tile (8 -> 128 padded lanes).
    B = 8
    z = jax.random.normal(kz1, (B, 2), dtype=jnp.float32)
    z_out, log_det = realnvp_forward(z, fused)
    jax.block_until_ready((z_out, log_det))
    z_ref, ld_ref = realnvp_reference(z, params)
    assert z_out.shape == (B, 2) and log_det.shape == (B,)
    assert jnp.allclose(z_out, z_ref, atol=ATOL, rtol=RTOL)
    assert jnp.allclose(log_det, ld_ref, atol=ATOL, rtol=RTOL)

    # Channel-major entry point (no wrapper transpose) agrees with the (B,2) API.
    z_out_cm, ld_cm = realnvp_forward_cm(z.T, fused)
    jax.block_until_ready((z_out_cm, ld_cm))
    assert jnp.allclose(z_out_cm.T, z_out, atol=1e-6, rtol=1e-6)
    assert jnp.allclose(ld_cm, log_det, atol=1e-6, rtol=1e-6)

    # Non-multiple-of-128 batch: exercises padding and the >= 2-step grid
    # (B=300 -> 2 tiles of 256 lanes; the parallel axis can split across v7x cores).
    B2 = 300
    z_b = jax.random.normal(kz2, (B2, 2), dtype=jnp.float32)
    z_out_b, log_det_b = realnvp_forward(z_b, fused)
    jax.block_until_ready((z_out_b, log_det_b))
    z_ref_b, ld_ref_b = realnvp_reference(z_b, params)
    assert z_out_b.shape == (B2, 2) and log_det_b.shape == (B2,)
    assert jnp.allclose(z_out_b, z_ref_b, atol=ATOL, rtol=RTOL)
    assert jnp.allclose(log_det_b, ld_ref_b, atol=ATOL, rtol=RTOL)

    print("KERNEL_OK")
</pallas_src>

<mosaic_0001>
module attributes {stable_mosaic.version = 11 : i64} {
  func.func @realnvp_kernel(%arg0: i32, %arg1: memref<2x128xf32, #tpu.memory_space<vmem>>, %arg2: memref<2x64x4xf32, #tpu.memory_space<vmem>>, %arg3: memref<2x64x64xbf16, #tpu.memory_space<vmem>>, %arg4: memref<2x2x64xf32, #tpu.memory_space<vmem>>, %arg5: memref<3x128xf32, #tpu.memory_space<vmem>>) attributes {dimension_semantics = [#tpu.dimension_semantics<parallel>], iteration_bounds = array<i64: 1>, scalar_prefetch = 0 : i64, scratch_operands = 0 : i64, tpu.core_type = #tpu.core_type<tc>, window_params = [{transform_indices = @transform_0, window_bounds = array<i64: 2, 128>}, {pipeline_mode = #tpu.pipeline_mode<synchronous>, transform_indices = @transform_1, window_bounds = array<i64: 2, 64, 4>}, {pipeline_mode = #tpu.pipeline_mode<synchronous>, transform_indices = @transform_2, window_bounds = array<i64: 2, 64, 64>}, {pipeline_mode = #tpu.pipeline_mode<synchronous>, transform_indices = @transform_3, window_bounds = array<i64: 2, 2, 64>}, {transform_indices = @transform_4, window_bounds = array<i64: 3, 128>}]} {
    %c0 = arith.constant 0 : index
    %c0_0 = arith.constant 0 : index
    %0 = vector.load %arg1[%c0, %c0_0] : memref<2x128xf32, #tpu.memory_space<vmem>>, vector<1x128xf32>
    %c1 = arith.constant 1 : index
    %c0_1 = arith.constant 0 : index
    %1 = vector.load %arg1[%c1, %c0_1] : memref<2x128xf32, #tpu.memory_space<vmem>>, vector<1x128xf32>
    %c0_2 = arith.constant 0 : index
    %c0_3 = arith.constant 0 : index
    %c0_4 = arith.constant 0 : index
    %2 = vector.load %arg2[%c0_2, %c0_3, %c0_4] : memref<2x64x4xf32, #tpu.memory_space<vmem>>, vector<1x64x4xf32>
    %3 = vector.shape_cast %2 : vector<1x64x4xf32> to vector<64x4xf32>
    %4 = vector.extract_strided_slice %3 {offsets = [0, 0], sizes = [64, 1], strides = [1, 1]} : vector<64x4xf32> to vector<64x1xf32>
    %5 = vector.extract_strided_slice %3 {offsets = [0, 1], sizes = [64, 1], strides = [1, 1]} : vector<64x4xf32> to vector<64x1xf32>
    %6 = vector.extract_strided_slice %3 {offsets = [0, 2], sizes = [64, 1], strides = [1, 1]} : vector<64x4xf32> to vector<64x1xf32>
    %7 = vector.extract_strided_slice %3 {offsets = [0, 3], sizes = [2, 1], strides = [1, 1]} : vector<64x4xf32> to vector<2x1xf32>
    %8 = vector.broadcast %4 : vector<64x1xf32> to vector<64x128xf32>
    %9 = vector.broadcast %0 : vector<1x128xf32> to vector<64x128xf32>
    %10 = arith.mulf %8, %9 : vector<64x128xf32>
    %11 = vector.broadcast %5 : vector<64x1xf32> to vector<64x128xf32>
    %12 = arith.addf %10, %11 : vector<64x128xf32>
    %cst = arith.constant 0.000000e+00 : f32
    %13 = vector.broadcast %cst : f32 to vector<64x128xf32>
    %14 = arith.maximumf %12, %13 : vector<64x128xf32>
    %c0_5 = arith.constant 0 : index
    %c0_6 = arith.constant 0 : index
    %c0_7 = arith.constant 0 : index
    %15 = vector.load %arg3[%c0_5, %c0_6, %c0_7] : memref<2x64x64xbf16, #tpu.memory_space<vmem>>, vector<1x64x64xbf16>
    %16 = vector.shape_cast %15 : vector<1x64x64xbf16> to vector<64x64xbf16>
    %17 = arith.truncf %14 : vector<64x128xf32> to vector<64x128xbf16>
    %cst_8 = arith.constant dense<0.000000e+00> : vector<64x128xf32>
    %18 = tpu.matmul %16, %17, %cst_8 {dimension_numbers = #tpu.dot_dimension_numbers<[1], [0], [0], [1], [0, 0, 1, 1], [], []>} : vector<64x64xbf16>, vector<64x128xbf16>, vector<64x128xf32> -> vector<64x128xf32>
    %19 = vector.broadcast %6 : vector<64x1xf32> to vector<64x128xf32>
    %20 = arith.addf %18, %19 : vector<64x128xf32>
    %cst_9 = arith.constant 0.000000e+00 : f32
    %21 = vector.broadcast %cst_9 : f32 to vector<64x128xf32>
    %22 = arith.maximumf %20, %21 : vector<64x128xf32>
    %c0_10 = arith.constant 0 : index
    %c0_11 = arith.constant 0 : index
    %c0_12 = arith.constant 0 : index
    %23 = vector.load %arg4[%c0_10, %c0_11, %c0_12] : memref<2x2x64xf32, #tpu.memory_space<vmem>>, vector<1x2x64xf32>
    %24 = vector.shape_cast %23 : vector<1x2x64xf32> to vector<2x64xf32>
    %cst_13 = arith.constant dense<0.000000e+00> : vector<2x128xf32>
    %25 = tpu.matmul %24, %22, %cst_13 {dimension_numbers = #tpu.dot_dimension_numbers<[1], [0], [0], [1], [0, 0, 1, 1], [], []>} : vector<2x64xf32>, vector<64x128xf32>, vector<2x128xf32> -> vector<2x128xf32>
    %26 = vector.broadcast %7 : vector<2x1xf32> to vector<2x128xf32>
    %27 = arith.addf %25, %26 : vector<2x128xf32>
    %28 = vector.extract_strided_slice %27 {offsets = [0, 0], sizes = [1, 128], strides = [1, 1]} : vector<2x128xf32> to vector<1x128xf32>
    %29 = math.exp %28 : vector<1x128xf32>
    %30 = arith.mulf %1, %29 : vector<1x128xf32>
    %31 = vector.extract_strided_slice %27 {offsets = [1, 0], sizes = [1, 128], strides = [1, 1]} : vector<2x128xf32> to vector<1x128xf32>
    %32 = arith.addf %30, %31 : vector<1x128xf32>
    %c1_14 = arith.constant 1 : index
    %c0_15 = arith.constant 0 : index
    %c0_16 = arith.constant 0 : index
    %33 = vector.load %arg2[%c1_14, %c0_15, %c0_16] : memref<2x64x4xf32, #tpu.memory_space<vmem>>, vector<1x64x4xf32>
    %34 = vector.shape_cast %33 : vector<1x64x4xf32> to vector<64x4xf32>
    %35 = vector.extract_strided_slice %34 {offsets = [0, 0], sizes = [64, 1], strides = [1, 1]} : vector<64x4xf32> to vector<64x1xf32>
    %36 = vector.extract_strided_slice %34 {offsets = [0, 1], sizes = [64, 1], strides = [1, 1]} : vector<64x4xf32> to vector<64x1xf32>
    %37 = vector.extract_strided_slice %34 {offsets = [0, 2], sizes = [64, 1], strides = [1, 1]} : vector<64x4xf32> to vector<64x1xf32>
    %38 = vector.extract_strided_slice %34 {offsets = [0, 3], sizes = [2, 1], strides = [1, 1]} : vector<64x4xf32> to vector<2x1xf32>
    %39 = vector.broadcast %35 : vector<64x1xf32> to vector<64x128xf32>
    %40 = vector.broadcast %32 : vector<1x128xf32> to vector<64x128xf32>
    %41 = arith.mulf %39, %40 : vector<64x128xf32>
    %42 = vector.broadcast %36 : vector<64x1xf32> to vector<64x128xf32>
    %43 = arith.addf %41, %42 : vector<64x128xf32>
    %cst_17 = arith.constant 0.000000e+00 : f32
    %44 = vector.broadcast %cst_17 : f32 to vector<64x128xf32>
    %45 = arith.maximumf %43, %44 : vector<64x128xf32>
    %c1_18 = arith.constant 1 : index
    %c0_19 = arith.constant 0 : index
    %c0_20 = arith.constant 0 : index
    %46 = vector.load %arg3[%c1_18, %c0_19, %c0_20] : memref<2x64x64xbf16, #tpu.memory_space<vmem>>, vector<1x64x64xbf16>
    %47 = vector.shape_cast %46 : vector<1x64x64xbf16> to vector<64x64xbf16>
    %48 = arith.truncf %45 : vector<64x128xf32> to vector<64x128xbf16>
    %cst_21 = arith.constant dense<0.000000e+00> : vector<64x128xf32>
    %49 = tpu.matmul %47, %48, %cst_21 {dimension_numbers = #tpu.dot_dimension_numbers<[1], [0], [0], [1], [0, 0, 1, 1], [], []>} : vector<64x64xbf16>, vector<64x128xbf16>, vector<64x128xf32> -> vector<64x128xf32>
    %50 = vector.broadcast %37 : vector<64x1xf32> to vector<64x128xf32>
    %51 = arith.addf %49, %50 : vector<64x128xf32>
    %cst_22 = arith.constant 0.000000e+00 : f32
    %52 = vector.broadcast %cst_22 : f32 to vector<64x128xf32>
    %53 = arith.maximumf %51, %52 : vector<64x128xf32>
    %c1_23 = arith.constant 1 : index
    %c0_24 = arith.constant 0 : index
    %c0_25 = arith.constant 0 : index
    %54 = vector.load %arg4[%c1_23, %c0_24, %c0_25] : memref<2x2x64xf32, #tpu.memory_space<vmem>>, vector<1x2x64xf32>
    %55 = vector.shape_cast %54 : vector<1x2x64xf32> to vector<2x64xf32>
    %cst_26 = arith.constant dense<0.000000e+00> : vector<2x128xf32>
    %56 = tpu.matmul %55, %53, %cst_26 {dimension_numbers = #tpu.dot_dimension_numbers<[1], [0], [0], [1], [0, 0, 1, 1], [], []>} : vector<2x64xf32>, vector<64x128xf32>, vector<2x128xf32> -> vector<2x128xf32>
    %57 = vector.broadcast %38 : vector<2x1xf32> to vector<2x128xf32>
    %58 = arith.addf %56, %57 : vector<2x128xf32>
    %59 = vector.extract_strided_slice %58 {offsets = [0, 0], sizes = [1, 128], strides = [1, 1]} : vector<2x128xf32> to vector<1x128xf32>
    %60 = math.exp %59 : vector<1x128xf32>
    %61 = arith.mulf %0, %60 : vector<1x128xf32>
    %62 = vector.extract_strided_slice %58 {offsets = [1, 0], sizes = [1, 128], strides = [1, 1]} : vector<2x128xf32> to vector<1x128xf32>
    %63 = arith.addf %61, %62 : vector<1x128xf32>
    %c0_27 = arith.constant 0 : index
    %c0_28 = arith.constant 0 : index
    %64 = vector.load %arg5[%c0_27, %c0_28] : memref<3x128xf32, #tpu.memory_space<vmem>>, vector<1x128xf32>
    tpu.vector_store %arg5[%c0_27, %c0_28], %63 {strides = array<i32>} : memref<3x128xf32, #tpu.memory_space<vmem>>, vector<1x128xf32>,
    %c1_29 = arith.constant 1 : index
    %c0_30 = arith.constant 0 : index
    %65 = vector.load %arg5[%c1_29, %c0_30] : memref<3x128xf32, #tpu.memory_space<vmem>>, vector<1x128xf32>
    tpu.vector_store %arg5[%c1_29, %c0_30], %32 {strides = array<i32>} : memref<3x128xf32, #tpu.memory_space<vmem>>, vector<1x128xf32>,
    %66 = arith.addf %28, %59 : vector<1x128xf32>
    %c2 = arith.constant 2 : index
    %c0_31 = arith.constant 0 : index
    %67 = vector.load %arg5[%c2, %c0_31] : memref<3x128xf32, #tpu.memory_space<vmem>>, vector<1x128xf32>
    tpu.vector_store %arg5[%c2, %c0_31], %66 {strides = array<i32>} : memref<3x128xf32, #tpu.memory_space<vmem>>, vector<1x128xf32>,
    return
  }
  func.func @transform_0(%arg0: i32) -> (i32, i32) {
    %c0_i32 = arith.constant 0 : i32
    %c0_i32_0 = arith.constant 0 : i32
    return %c0_i32, %arg0 : i32, i32
  }
  func.func @transform_1(%arg0: i32) -> (i32, i32, i32) {
    %c0_i32 = arith.constant 0 : i32
    %c0_i32_0 = arith.constant 0 : i32
    %c0_i32_1 = arith.constant 0 : i32
    %c0_i32_2 = arith.constant 0 : i32
    return %c0_i32, %c0_i32_0, %c0_i32_1 : i32, i32, i32
  }
  func.func @transform_2(%arg0: i32) -> (i32, i32, i32) {
    %c0_i32 = arith.constant 0 : i32
    %c0_i32_0 = arith.constant 0 : i32
    %c0_i32_1 = arith.constant 0 : i32
    %c0_i32_2 = arith.constant 0 : i32
    return %c0_i32, %c0_i32_0, %c0_i32_1 : i32, i32, i32
  }
  func.func @transform_3(%arg0: i32) -> (i32, i32, i32) {
    %c0_i32 = arith.constant 0 : i32
    %c0_i32_0 = arith.constant 0 : i32
    %c0_i32_1 = arith.constant 0 : i32
    %c0_i32_2 = arith.constant 0 : i32
    return %c0_i32, %c0_i32_0, %c0_i32_1 : i32, i32, i32
  }
  func.func @transform_4(%arg0: i32) -> (i32, i32) {
    %c0_i32 = arith.constant 0 : i32
    %c0_i32_0 = arith.constant 0 : i32
    return %c0_i32, %arg0 : i32, i32
  }
}

</mosaic_0001>

<llo_original>
// kernel: realnvp_forward.1
$region0: #{realnvp_forward.1}
  #allocation0 [shape = 'u32[]', space=smem, size = 0x4, offset = 0x4, fixed_abs, tag = 'smem constant byte address 0x4 - core index']
  #allocation1 [shape = 'u32[144,128]{1,0:T(1,128)}', space=vmem, size = 0x12000, scoped, tag = 'internal scratch']
  %s0 = inlined_call_operand.vmem [shape: f32[2,128], index: 0, kind: input, shape index: {}]
  %s1 = inlined_call_operand.vmem [shape: f32[2,64,4], index: 1, kind: input, shape index: {}]
  %s2 = inlined_call_operand.vmem [shape: bf16[2,64,64], index: 2, kind: input, shape index: {}]
  %s3 = inlined_call_operand.vmem [shape: f32[2,2,64], index: 3, kind: input, shape index: {}]
  %s4 = inlined_call_operand.vmem [shape: f32[3,128], index: 4, kind: output, shape index: {}]
  %s5 = sld [smem:[#allocation0]]
  $region26: #{realnvp_forward.1} parent=0
    _
  %s7 = ssub.s32 1, %s5
  %s8 = scalar_select 0, %s7, %s5
  // Predicated region
  $region2: #{realnvp_forward.1} parent=0 // pred_check
    _
  $region3: #{realnvp_forward.1} parent=0 // pred_check_branch
    %10 = sbr.rel (0) target = $region5
  $region4: #{realnvp_forward.1} parent=0 // pred_region
    _
  $region5: #{realnvp_forward.1} parent=0 // pred_fallthru
    _
  // Predicated region
  $region6: #{realnvp_forward.1} parent=0 // pred_check
    _
  $region7: #{realnvp_forward.1} parent=0 // pred_check_branch
    %12 = sbr.rel (0) target = $region9
  $region8: #{realnvp_forward.1} parent=0 // pred_region
    _
  $region9: #{realnvp_forward.1} parent=0 // pred_fallthru
    _
  // Predicated region
  $region10: #{realnvp_forward.1} parent=0 // pred_check
    _
  $region11: #{realnvp_forward.1} parent=0 // pred_check_branch
    %14 = sbr.rel (0) target = $region13
  $region12: #{realnvp_forward.1} parent=0 // pred_region
    _
  $region13: #{realnvp_forward.1} parent=0 // pred_fallthru
    _
  // Predicated region
  $region14: #{realnvp_forward.1} parent=0 // pred_check
    _
  $region15: #{realnvp_forward.1} parent=0 // pred_check_branch
    %16 = sbr.rel (0) target = $region17
  $region16: #{realnvp_forward.1} parent=0 // pred_region
    _
  $region17: #{realnvp_forward.1} parent=0 // pred_fallthru
    _
  %v18 = vld [vmem:[%s0] sm:$0x1]
  %v19 = vld [vmem:[%s0 + $0x1] sm:$0x1]
  %v20 = vld [vmem:[%s1] sm:$0xff]
  %v21 = vld [vmem:[%s1 + $0x8] sm:$0xff]
  %v22 = vld [vmem:[%s1 + $0x10] sm:$0xff]
  %v23 = vld [vmem:[%s1 + $0x18] sm:$0xff]
  %v24 = vld [vmem:[%s1 + $0x20] sm:$0xff]
  %v25 = vld [vmem:[%s1 + $0x28] sm:$0xff]
  %v26 = vld [vmem:[%s1 + $0x30] sm:$0xff]
  %v27 = vld [vmem:[%s1 + $0x38] sm:$0xff]
  %29 = vset.pattern.permute.xlu0 0
  %30 = vperm.xlu0 %29, %v20
  %v31 = vpop.permute.xlu0 %30
  %34 = vset.pattern.permute.xlu0 0
  %35 = vperm.xlu0 %34, %v21
  %v36 = vpop.permute.xlu0 %35
  %39 = vset.pattern.permute.xlu0 0
  %40 = vperm.xlu0 %39, %v22
  %v41 = vpop.permute.xlu0 %40
  %44 = vset.pattern.permute.xlu0 0
  %45 = vperm.xlu0 %44, %v23
  %v46 = vpop.permute.xlu0 %45
  %49 = vset.pattern.permute.xlu0 0
  %50 = vperm.xlu0 %49, %v24
  %v51 = vpop.permute.xlu0 %50
  %54 = vset.pattern.permute.xlu0 0
  %55 = vperm.xlu0 %54, %v25
  %v56 = vpop.permute.xlu0 %55
  %59 = vset.pattern.permute.xlu0 0
  %60 = vperm.xlu0 %59, %v26
  %v61 = vpop.permute.xlu0 %60
  %64 = vset.pattern.permute.xlu0 0
  %65 = vperm.xlu0 %64, %v27
  %v66 = vpop.permute.xlu0 %65
  %v68 = vlaneseq
  %v69 = vshrl.u32 %v68, 7
  %v70 = vsub.s32 0, %v69
  %v71 = vrot.slane %v18, %v70
  %v72 = vmul.f32 %v31, %v71
  %v73 = vmul.f32 %v36, %v71
  %v74 = vmul.f32 %v41, %v71
  %v75 = vmul.f32 %v46, %v71
  %v76 = vmul.f32 %v51, %v71
  %v77 = vmul.f32 %v56, %v71
  %v78 = vmul.f32 %v61, %v71
  %v79 = vmul.f32 %v66, %v71
  %80 = vset.pattern.permute.xlu0 1
  %81 = vperm.xlu0 %80, %v20
  %v82 = vpop.permute.xlu0 %81
  %84 = vset.pattern.permute.xlu0 1
  %85 = vperm.xlu0 %84, %v21
  %v86 = vpop.permute.xlu0 %85
  %88 = vset.pattern.permute.xlu0 1
  %89 = vperm.xlu0 %88, %v22
  %v90 = vpop.permute.xlu0 %89
  %92 = vset.pattern.permute.xlu0 1
  %93 = vperm.xlu0 %92, %v23
  %v94 = vpop.permute.xlu0 %93
  %96 = vset.pattern.permute.xlu0 1
  %97 = vperm.xlu0 %96, %v24
  %v98 = vpop.permute.xlu0 %97
  %100 = vset.pattern.permute.xlu0 1
  %101 = vperm.xlu0 %100, %v25
  %v102 = vpop.permute.xlu0 %101
  %104 = vset.pattern.permute.xlu0 1
  %105 = vperm.xlu0 %104, %v26
  %v106 = vpop.permute.xlu0 %105
  %108 = vset.pattern.permute.xlu0 1
  %109 = vperm.xlu0 %108, %v27
  %v110 = vpop.permute.xlu0 %109
  %v112 = vadd.f32 %v72, %v82
  %v113 = vadd.f32 %v73, %v86
  %v114 = vadd.f32 %v74, %v90
  %v115 = vadd.f32 %v75, %v94
  %v116 = vadd.f32 %v76, %v98
  %v117 = vadd.f32 %v77, %v102
  %v118 = vadd.f32 %v78, %v106
  %v119 = vadd.f32 %v79, %v110
  %v120 = vmax.f32 %v112, 0.0
  %v121 = vmax.f32 %v113, 0.0
  %v122 = vmax.f32 %v114, 0.0
  %v123 = vmax.f32 %v115, 0.0
  %v124 = vmax.f32 %v116, 0.0
  %v125 = vmax.f32 %v117, 0.0
  %v126 = vmax.f32 %v118, 0.0
  %v127 = vmax.f32 %v119, 0.0
  %v128 = vld [vmem:[%s2] sm:$0xf]
  %v129 = vld [vmem:[%s2 + $0x4] sm:$0xf]
  %v130 = vld [vmem:[%s2 + $0x8] sm:$0xf]
  %v131 = vld [vmem:[%s2 + $0xc] sm:$0xf]
  %v132 = vld [vmem:[%s2 + $0x10] sm:$0xf]
  %v133 = vld [vmem:[%s2 + $0x14] sm:$0xf]
  %v134 = vld [vmem:[%s2 + $0x18] sm:$0xf]
  %v135 = vld [vmem:[%s2 + $0x1c] sm:$0xf]
  %v136 = vpack.c.bf16 %v121, %v120
  %v137 = vpack.c.bf16 %v123, %v122
  %v138 = vpack.c.bf16 %v125, %v124
  %v139 = vpack.c.bf16 %v127, %v126
  %140 = vset.pattern.permute.xlu0 2
  %141 = vperm.xlu0 %140, %v20
  %v142 = vpop.permute.xlu0 %141
  %144 = vset.pattern.permute.xlu0 2
  %145 = vperm.xlu0 %144, %v21
  %v146 = vpop.permute.xlu0 %145
  %148 = vset.pattern.permute.xlu0 2
  %149 = vperm.xlu0 %148, %v22
  %v150 = vpop.permute.xlu0 %149
  %152 = vset.pattern.permute.xlu0 2
  %153 = vperm.xlu0 %152, %v23
  %v154 = vpop.permute.xlu0 %153
  %156 = vset.pattern.permute.xlu0 2
  %157 = vperm.xlu0 %156, %v24
  %v158 = vpop.permute.xlu0 %157
  %160 = vset.pattern.permute.xlu0 2
  %161 = vperm.xlu0 %160, %v25
  %v162 = vpop.permute.xlu0 %161
  %164 = vset.pattern.permute.xlu0 2
  %165 = vperm.xlu0 %164, %v26
  %v166 = vpop.permute.xlu0 %165
  %168 = vset.pattern.permute.xlu0 2
  %169 = vperm.xlu0 %168, %v27
  %v170 = vpop.permute.xlu0 %169
  %v180 = vunpack.c.l.b16 %v128
  %v181 = vunpack.c.l.b16 %v129
  %v182 = vunpack.c.l.b16 %v130
  %v183 = vunpack.c.l.b16 %v131
  %v184 = vunpack.c.l.b16 %v132
  %v185 = vunpack.c.l.b16 %v133
  %v186 = vunpack.c.l.b16 %v134
  %v187 = vunpack.c.l.b16 %v135
  %v188 = vpack.c.b16 %v181, %v180
  %v189 = vpack.c.b16 %v183, %v182
  %v190 = vpack.c.b16 %v185, %v184
  %v191 = vpack.c.b16 %v187, %v186
  %vm192 = vcmask 523264
  %v194 = vsel %vm192, %v188, 0
  %v197 = vsel %vm192, %v189, 0
  %v200 = vsel %vm192, %v190, 0
  %v203 = vsel %vm192, %v191, 0
  %205 = vmatprep.subr.bf16.mxu0 0
  %206 = vmatpush1.bf16.msra.mxu0 0
  %207 = vmatprep.subr.bf16.mxu0 0
  %208 = vmatpush1.bf16.msra.mxu0 0
  %209 = vmatprep.subr.bf16.mxu0 0
  %210 = vmatpush1.bf16.msra.mxu0 0
  %211 = vmatprep.subr.bf16.mxu0 0
  %212 = vmatpush1.bf16.msra.mxu0 0
  %213 = vmatprep.subr.bf16.mxu0 0
  %214 = vmatpush1.bf16.msra.mxu0 %v139
  %215 = vmatprep.subr.bf16.mxu0 0
  %216 = vmatpush1.bf16.msra.mxu0 %v138
  %217 = vmatprep.subr.bf16.mxu0 0
  %218 = vmatpush1.bf16.msra.mxu0 %v137
  %219 = vmatprep.subr.bf16.mxu0 0
  %220 = vmatpush1.bf16.msra.mxu0 %v136
  %221 = vmatprep.subr.bf16.mxu0 0
  %222 = vmatpush2.bf16.msra.mxu0 0
  %223 = vmatprep.subr.bf16.mxu0 0
  %224 = vmatpush2.bf16.msra.mxu0 0
  %225 = vmatprep.subr.bf16.mxu0 0
  %226 = vmatpush2.bf16.msra.mxu0 0
  %227 = vmatprep.subr.bf16.mxu0 0
  %228 = vmatpush2.bf16.msra.mxu0 0
  %229 = vmatprep.subr.bf16.mxu0 0
  %230 = vmatpush2.bf16.msra.mxu0 0
  %231 = vmatprep.subr.bf16.mxu0 0
  %232 = vmatpush2.bf16.msra.mxu0 0
  %233 = vmatprep.subr.bf16.mxu0 0
  %234 = vmatpush2.bf16.msra.mxu0 0
  %235 = vmatprep.subr.bf16.mxu0 0
  %236 = vmatpush2.bf16.msra.mxu0 0
  %237 = vmatprep.mubr.bf16.mxu0 0
  %238 = vmatmul.mubr.bf16.gmra.mxu0 %v194
  %v239 = vpop.f32.mrf.mxu0
  %v240 = vadd.f32 %v142, %v239
  %v241 = vpop.f32.mrf.mxu0
  %v242 = vpop.f32.mrf.mxu0
  %v243 = vadd.f32 %v146, %v242
  %v244 = vpop.f32.mrf.mxu0
  %245 = vmatprep.mubr.bf16.mxu0 0
  %246 = vmatmul.mubr.bf16.gmra.mxu0 %v197
  %v247 = vpop.f32.mrf.mxu0
  %v248 = vadd.f32 %v150, %v247
  %v249 = vpop.f32.mrf.mxu0
  %v250 = vpop.f32.mrf.mxu0
  %v251 = vadd.f32 %v154, %v250
  %v252 = vpop.f32.mrf.mxu0
  %253 = vmatprep.mubr.bf16.mxu0 0
  %254 = vmatmul.mubr.bf16.gmra.mxu0 %v200
  %v255 = vpop.f32.mrf.mxu0
  %v256 = vadd.f32 %v158, %v255
  %v257 = vpop.f32.mrf.mxu0
  %v258 = vpop.f32.mrf.mxu0
  %v259 = vadd.f32 %v162, %v258
  %v260 = vpop.f32.mrf.mxu0
  %261 = vmatprep.mubr.bf16.mxu0 0
  %262 = vmatmul.mubr.bf16.gmra.mxu0 %v203
  %v263 = vpop.f32.mrf.mxu0
  %v264 = vadd.f32 %v166, %v263
  %v265 = vpop.f32.mrf.mxu0
  %v266 = vpop.f32.mrf.mxu0
  %v267 = vadd.f32 %v170, %v266
  %v268 = vpop.f32.mrf.mxu0
  %269 = vdwg.mxu0
  %v270 = vmax.f32 %v240, 0.0
  %v271 = vmax.f32 %v243, 0.0
  %v272 = vmax.f32 %v248, 0.0
  %v273 = vmax.f32 %v251, 0.0
  %v274 = vmax.f32 %v256, 0.0
  %v275 = vmax.f32 %v259, 0.0
  %v276 = vmax.f32 %v264, 0.0
  %v277 = vmax.f32 %v267, 0.0
  %v278 = vld [vmem:[%s3] sm:$0x3]
  %279 = vset.pattern.permute.xlu0 3
  %280 = vperm.xlu0 %279, %v20
  %v281 = vpop.permute.xlu0 %280
  %v284 = vsel %vm192, %v278, 0
  %286 = vmatprep.subr.mxu0 0.0
  %287 = vmatpush1.msra.mxu0 0.0
  %288 = vmatprep.subr.mxu0 0.0
  %289 = vmatpush1.msra.mxu0 0.0
  %290 = vmatprep.subr.mxu0 0.0
  %291 = vmatpush1.msra.mxu0 0.0
  %292 = vmatprep.subr.mxu0 0.0
  %293 = vmatpush1.msra.mxu0 0.0
  %294 = vmatprep.subr.mxu0 0.0
  %295 = vmatpush1.msra.mxu0 0.0
  %296 = vmatprep.subr.mxu0 0.0
  %297 = vmatpush1.msra.mxu0 0.0
  %298 = vmatprep.subr.mxu0 0.0
  %299 = vmatpush1.msra.mxu0 0.0
  %300 = vmatprep.subr.mxu0 0.0
  %301 = vmatpush1.msra.mxu0 0.0
  %302 = vmatprep.subr.mxu0 0.0
  %303 = vmatpush1.msra.mxu0 %v277
  %304 = vmatprep.subr.mxu0 0.0
  %305 = vmatpush1.msra.mxu0 %v276
  %306 = vmatprep.subr.mxu0 0.0
  %307 = vmatpush1.msra.mxu0 %v275
  %308 = vmatprep.subr.mxu0 0.0
  %309 = vmatpush1.msra.mxu0 %v274
  %310 = vmatprep.subr.mxu0 0.0
  %311 = vmatpush1.msra.mxu0 %v273
  %312 = vmatprep.subr.mxu0 0.0
  %313 = vmatpush1.msra.mxu0 %v272
  %314 = vmatprep.subr.mxu0 0.0
  %315 = vmatpush1.msra.mxu0 %v271
  %316 = vmatprep.subr.mxu0 0.0
  %317 = vmatpush1.msra.mxu0 %v270
  %318 = vmatprep.subr.mxu0 0.0
  %319 = vmatpush2.msra.mxu0 0.0
  %320 = vmatprep.subr.mxu0 0.0
  %321 = vmatpush2.msra.mxu0 0.0
  %322 = vmatprep.subr.mxu0 0.0
  %323 = vmatpush2.msra.mxu0 0.0
  %324 = vmatprep.subr.mxu0 0.0
  %325 = vmatpush2.msra.mxu0 0.0
  %326 = vmatprep.subr.mxu0 0.0
  %327 = vmatpush2.msra.mxu0 0.0
  %328 = vmatprep.subr.mxu0 0.0
  %329 = vmatpush2.msra.mxu0 0.0
  %330 = vmatprep.subr.mxu0 0.0
  %331 = vmatpush2.msra.mxu0 0.0
  %332 = vmatprep.subr.mxu0 0.0
  %333 = vmatpush2.msra.mxu0 0.0
  %334 = vmatprep.subr.mxu0 0.0
  %335 = vmatpush2.msra.mxu0 0.0
  %336 = vmatprep.subr.mxu0 0.0
  %337 = vmatpush2.msra.mxu0 0.0
  %338 = vmatprep.subr.mxu0 0.0
  %339 = vmatpush2.msra.mxu0 0.0
  %340 = vmatprep.subr.mxu0 0.0
  %341 = vmatpush2.msra.mxu0 0.0
  %342 = vmatprep.subr.mxu0 0.0
  %343 = vmatpush2.msra.mxu0 0.0
  %344 = vmatprep.subr.mxu0 0.0
  %345 = vmatpush2.msra.mxu0 0.0
  %346 = vmatprep.subr.mxu0 0.0
  %347 = vmatpush2.msra.mxu0 0.0
  %348 = vmatprep.subr.mxu0 0.0
  %349 = vmatpush2.msra.mxu0 0.0
  %350 = vmatprep.mubr.f32.mxu0 0.0
  %351 = vmatmul.mubr.f32.gmra.mxu0 %v284
  %v352 = vpop.f32.mrf.mxu0
  %v353 = vadd.f32 %v281, %v352
  %v354 = vpop.f32.mrf.mxu0
  %355 = vdwg.mxu0
  %v356 = vmul.f32 %v353, 1.442695
  %v357 = vpow.pop %v356
  %v358 = vmul.f32 %v19, %v357
  %v360 = vrot.slane %v353, 1
  %v362 = vadd.f32 %v358, %v360
  %s363 = scalar_lea.vmem %s1, 64
  %v364 = vld [vmem:[%s363] sm:$0xff]
  %v365 = vld [vmem:[%s363 + $0x8] sm:$0xff]
  %v366 = vld [vmem:[%s363 + $0x10] sm:$0xff]
  %v367 = vld [vmem:[%s363 + $0x18] sm:$0xff]
  %v368 = vld [vmem:[%s363 + $0x20] sm:$0xff]
  %v369 = vld [vmem:[%s363 + $0x28] sm:$0xff]
  %v370 = vld [vmem:[%s363 + $0x30] sm:$0xff]
  %v371 = vld [vmem:[%s363 + $0x38] sm:$0xff]
  %373 = vset.pattern.permute.xlu0 0
  %374 = vperm.xlu0 %373, %v364
  %v375 = vpop.permute.xlu0 %374
  %378 = vset.pattern.permute.xlu0 0
  %379 = vperm.xlu0 %378, %v365
  %v380 = vpop.permute.xlu0 %379
  %383 = vset.pattern.permute.xlu0 0
  %384 = vperm.xlu0 %383, %v366
  %v385 = vpop.permute.xlu0 %384
  %388 = vset.pattern.permute.xlu0 0
  %389 = vperm.xlu0 %388, %v367
  %v390 = vpop.permute.xlu0 %389
  %393 = vset.pattern.permute.xlu0 0
  %394 = vperm.xlu0 %393, %v368
  %v395 = vpop.permute.xlu0 %394
  %398 = vset.pattern.permute.xlu0 0
  %399 = vperm.xlu0 %398, %v369
  %v400 = vpop.permute.xlu0 %399
  %403 = vset.pattern.permute.xlu0 0
  %404 = vperm.xlu0 %403, %v370
  %v405 = vpop.permute.xlu0 %404
  %408 = vset.pattern.permute.xlu0 0
  %409 = vperm.xlu0 %408, %v371
  %v410 = vpop.permute.xlu0 %409
  %v412 = vlaneseq
  %v413 = vshrl.u32 %v412, 7
  %v414 = vsub.s32 0, %v413
  %v415 = vrot.slane %v362, %v414
  %v416 = vmul.f32 %v375, %v415
  %v417 = vmul.f32 %v380, %v415
  %v418 = vmul.f32 %v385, %v415
  %v419 = vmul.f32 %v390, %v415
  %v420 = vmul.f32 %v395, %v415
  %v421 = vmul.f32 %v400, %v415
  %v422 = vmul.f32 %v405, %v415
  %v423 = vmul.f32 %v410, %v415
  %424 = vset.pattern.permute.xlu0 1
  %425 = vperm.xlu0 %424, %v364
  %v426 = vpop.permute.xlu0 %425
  %428 = vset.pattern.permute.xlu0 1
  %429 = vperm.xlu0 %428, %v365
  %v430 = vpop.permute.xlu0 %429
  %432 = vset.pattern.permute.xlu0 1
  %433 = vperm.xlu0 %432, %v366
  %v434 = vpop.permute.xlu0 %433
  %436 = vset.pattern.permute.xlu0 1
  %437 = vperm.xlu0 %436, %v367
  %v438 = vpop.permute.xlu0 %437
  %440 = vset.pattern.permute.xlu0 1
  %441 = vperm.xlu0 %440, %v368
  %v442 = vpop.permute.xlu0 %441
  %444 = vset.pattern.permute.xlu0 1
  %445 = vperm.xlu0 %444, %v369
  %v446 = vpop.permute.xlu0 %445
  %448 = vset.pattern.permute.xlu0 1
  %449 = vperm.xlu0 %448, %v370
  %v450 = vpop.permute.xlu0 %449
  %452 = vset.pattern.permute.xlu0 1
  %453 = vperm.xlu0 %452, %v371
  %v454 = vpop.permute.xlu0 %453
  %v456 = vadd.f32 %v416, %v426
  %v457 = vadd.f32 %v417, %v430
  %v458 = vadd.f32 %v418, %v434
  %v459 = vadd.f32 %v419, %v438
  %v460 = vadd.f32 %v420, %v442
  %v461 = vadd.f32 %v421, %v446
  %v462 = vadd.f32 %v422, %v450
  %v463 = vadd.f32 %v423, %v454
  %v464 = vmax.f32 %v456, 0.0
  %v465 = vmax.f32 %v457, 0.0
  %v466 = vmax.f32 %v458, 0.0
  %v467 = vmax.f32 %v459, 0.0
  %v468 = vmax.f32 %v460, 0.0
  %v469 = vmax.f32 %v461, 0.0
  %v470 = vmax.f32 %v462, 0.0
  %v471 = vmax.f32 %v463, 0.0
  %s472 = scalar_lea.vmem %s2, 32
  %v473 = vld [vmem:[%s472] sm:$0xf]
  %v474 = vld [vmem:[%s472 + $0x4] sm:$0xf]
  %v475 = vld [vmem:[%s472 + $0x8] sm:$0xf]
  %v476 = vld [vmem:[%s472 + $0xc] sm:$0xf]
  %v477 = vld [vmem:[%s472 + $0x10] sm:$0xf]
  %v478 = vld [vmem:[%s472 + $0x14] sm:$0xf]
  %v479 = vld [vmem:[%s472 + $0x18] sm:$0xf]
  %v480 = vld [vmem:[%s472 + $0x1c] sm:$0xf]
  %v481 = vpack.c.bf16 %v465, %v464
  %v482 = vpack.c.bf16 %v467, %v466
  %v483 = vpack.c.bf16 %v469, %v468
  %v484 = vpack.c.bf16 %v471, %v470
  %485 = vset.pattern.permute.xlu0 2
  %486 = vperm.xlu0 %485, %v364
  %v487 = vpop.permute.xlu0 %486
  %489 = vset.pattern.permute.xlu0 2
  %490 = vperm.xlu0 %489, %v365
  %v491 = vpop.permute.xlu0 %490
  %493 = vset.pattern.permute.xlu0 2
  %494 = vperm.xlu0 %493, %v366
  %v495 = vpop.permute.xlu0 %494
  %497 = vset.pattern.permute.xlu0 2
  %498 = vperm.xlu0 %497, %v367
  %v499 = vpop.permute.xlu0 %498
  %501 = vset.pattern.permute.xlu0 2
  %502 = vperm.xlu0 %501, %v368
  %v503 = vpop.permute.xlu0 %502
  %505 = vset.pattern.permute.xlu0 2
  %506 = vperm.xlu0 %505, %v369
  %v507 = vpop.permute.xlu0 %506
  %509 = vset.pattern.permute.xlu0 2
  %510 = vperm.xlu0 %509, %v370
  %v511 = vpop.permute.xlu0 %510
  %513 = vset.pattern.permute.xlu0 2
  %514 = vperm.xlu0 %513, %v371
  %v515 = vpop.permute.xlu0 %514
  %v525 = vunpack.c.l.b16 %v473
  %v526 = vunpack.c.l.b16 %v474
  %v527 = vunpack.c.l.b16 %v475
  %v528 = vunpack.c.l.b16 %v476
  %v529 = vunpack.c.l.b16 %v477
  %v530 = vunpack.c.l.b16 %v478
  %v531 = vunpack.c.l.b16 %v479
  %v532 = vunpack.c.l.b16 %v480
  %v533 = vpack.c.b16 %v526, %v525
  %v534 = vpack.c.b16 %v528, %v527
  %v535 = vpack.c.b16 %v530, %v529
  %v536 = vpack.c.b16 %v532, %v531
  %v538 = vsel %vm192, %v533, 0
  %v541 = vsel %vm192, %v534, 0
  %v544 = vsel %vm192, %v535, 0
  %v547 = vsel %vm192, %v536, 0
  %549 = vmatprep.subr.bf16.mxu0 0
  %550 = vmatpush1.bf16.msra.mxu0 0
  %551 = vmatprep.subr.bf16.mxu0 0
  %552 = vmatpush1.bf16.msra.mxu0 0
  %553 = vmatprep.subr.bf16.mxu0 0
  %554 = vmatpush1.bf16.msra.mxu0 0
  %555 = vmatprep.subr.bf16.mxu0 0
  %556 = vmatpush1.bf16.msra.mxu0 0
  %557 = vmatprep.subr.bf16.mxu0 0
  %558 = vmatpush1.bf16.msra.mxu0 %v484
  %559 = vmatprep.subr.bf16.mxu0 0
  %560 = vmatpush1.bf16.msra.mxu0 %v483
  %561 = vmatprep.subr.bf16.mxu0 0
  %562 = vmatpush1.bf16.msra.mxu0 %v482
  %563 = vmatprep.subr.bf16.mxu0 0
  %564 = vmatpush1.bf16.msra.mxu0 %v481
  %565 = vmatprep.subr.bf16.mxu0 0
  %566 = vmatpush2.bf16.msra.mxu0 0
  %567 = vmatprep.subr.bf16.mxu0 0
  %568 = vmatpush2.bf16.msra.mxu0 0
  %569 = vmatprep.subr.bf16.mxu0 0
  %570 = vmatpush2.bf16.msra.mxu0 0
  %571 = vmatprep.subr.bf16.mxu0 0
  %572 = vmatpush2.bf16.msra.mxu0 0
  %573 = vmatprep.subr.bf16.mxu0 0
  %574 = vmatpush2.bf16.msra.mxu0 0
  %575 = vmatprep.subr.bf16.mxu0 0
  %576 = vmatpush2.bf16.msra.mxu0 0
  %577 = vmatprep.subr.bf16.mxu0 0
  %578 = vmatpush2.bf16.msra.mxu0 0
  %579 = vmatprep.subr.bf16.mxu0 0
  %580 = vmatpush2.bf16.msra.mxu0 0
  %581 = vmatprep.mubr.bf16.mxu0 0
  %582 = vmatmul.mubr.bf16.gmra.mxu0 %v538
  %v583 = vpop.f32.mrf.mxu0
  %v584 = vadd.f32 %v487, %v583
  %v585 = vpop.f32.mrf.mxu0
  %v586 = vpop.f32.mrf.mxu0
  %v587 = vadd.f32 %v491, %v586
  %v588 = vpop.f32.mrf.mxu0
  %589 = vmatprep.mubr.bf16.mxu0 0
  %590 = vmatmul.mubr.bf16.gmra.mxu0 %v541
  %v591 = vpop.f32.mrf.mxu0
  %v592 = vadd.f32 %v495, %v591
  %v593 = vpop.f32.mrf.mxu0
  %v594 = vpop.f32.mrf.mxu0
  %v595 = vadd.f32 %v499, %v594
  %v596 = vpop.f32.mrf.mxu0
  %597 = vmatprep.mubr.bf16.mxu0 0
  %598 = vmatmul.mubr.bf16.gmra.mxu0 %v544
  %v599 = vpop.f32.mrf.mxu0
  %v600 = vadd.f32 %v503, %v599
  %v601 = vpop.f32.mrf.mxu0
  %v602 = vpop.f32.mrf.mxu0
  %v603 = vadd.f32 %v507, %v602
  %v604 = vpop.f32.mrf.mxu0
  %605 = vmatprep.mubr.bf16.mxu0 0
  %606 = vmatmul.mubr.bf16.gmra.mxu0 %v547
  %v607 = vpop.f32.mrf.mxu0
  %v608 = vadd.f32 %v511, %v607
  %v609 = vpop.f32.mrf.mxu0
  %v610 = vpop.f32.mrf.mxu0
  %v611 = vadd.f32 %v515, %v610
  %v612 = vpop.f32.mrf.mxu0
  %613 = vdwg.mxu0
  %v614 = vmax.f32 %v584, 0.0
  %v615 = vmax.f32 %v587, 0.0
  %v616 = vmax.f32 %v592, 0.0
  %v617 = vmax.f32 %v595, 0.0
  %v618 = vmax.f32 %v600, 0.0
  %v619 = vmax.f32 %v603, 0.0
  %v620 = vmax.f32 %v608, 0.0
  %v621 = vmax.f32 %v611, 0.0
  %s622 = scalar_lea.vmem %s3, 2
  %v623 = vld [vmem:[%s622] sm:$0x3]
  %624 = vset.pattern.permute.xlu0 3
  %625 = vperm.xlu0 %624, %v364
  %v626 = vpop.permute.xlu0 %625
  %v629 = vsel %vm192, %v623, 0
  %631 = vmatprep.subr.mxu0 0.0
  %632 = vmatpush1.msra.mxu0 0.0
  %633 = vmatprep.subr.mxu0 0.0
  %634 = vmatpush1.msra.mxu0 0.0
  %635 = vmatprep.subr.mxu0 0.0
  %636 = vmatpush1.msra.mxu0 0.0
  %637 = vmatprep.subr.mxu0 0.0
  %638 = vmatpush1.msra.mxu0 0.0
  %639 = vmatprep.subr.mxu0 0.0
  %640 = vmatpush1.msra.mxu0 0.0
  %641 = vmatprep.subr.mxu0 0.0
  %642 = vmatpush1.msra.mxu0 0.0
  %643 = vmatprep.subr.mxu0 0.0
  %644 = vmatpush1.msra.mxu0 0.0
  %645 = vmatprep.subr.mxu0 0.0
  %646 = vmatpush1.msra.mxu0 0.0
  %647 = vmatprep.subr.mxu0 0.0
  %648 = vmatpush1.msra.mxu0 %v621
  %649 = vmatprep.subr.mxu0 0.0
  %650 = vmatpush1.msra.mxu0 %v620
  %651 = vmatprep.subr.mxu0 0.0
  %652 = vmatpush1.msra.mxu0 %v619
  %653 = vmatprep.subr.mxu0 0.0
  %654 = vmatpush1.msra.mxu0 %v618
  %655 = vmatprep.subr.mxu0 0.0
  %656 = vmatpush1.msra.mxu0 %v617
  %657 = vmatprep.subr.mxu0 0.0
  %658 = vmatpush1.msra.mxu0 %v616
  %659 = vmatprep.subr.mxu0 0.0
  %660 = vmatpush1.msra.mxu0 %v615
  %661 = vmatprep.subr.mxu0 0.0
  %662 = vmatpush1.msra.mxu0 %v614
  %663 = vmatprep.subr.mxu0 0.0
  %664 = vmatpush2.msra.mxu0 0.0
  %665 = vmatprep.subr.mxu0 0.0
  %666 = vmatpush2.msra.mxu0 0.0
  %667 = vmatprep.subr.mxu0 0.0
  %668 = vmatpush2.msra.mxu0 0.0
  %669 = vmatprep.subr.mxu0 0.0
  %670 = vmatpush2.msra.mxu0 0.0
  %671 = vmatprep.subr.mxu0 0.0
  %672 = vmatpush2.msra.mxu0 0.0
  %673 = vmatprep.subr.mxu0 0.0
  %674 = vmatpush2.msra.mxu0 0.0
  %675 = vmatprep.subr.mxu0 0.0
  %676 = vmatpush2.msra.mxu0 0.0
  %677 = vmatprep.subr.mxu0 0.0
  %678 = vmatpush2.msra.mxu0 0.0
  %679 = vmatprep.subr.mxu0 0.0
  %680 = vmatpush2.msra.mxu0 0.0
  %681 = vmatprep.subr.mxu0 0.0
  %682 = vmatpush2.msra.mxu0 0.0
  %683 = vmatprep.subr.mxu0 0.0
  %684 = vmatpush2.msra.mxu0 0.0
  %685 = vmatprep.subr.mxu0 0.0
  %686 = vmatpush2.msra.mxu0 0.0
  %687 = vmatprep.subr.mxu0 0.0
  %688 = vmatpush2.msra.mxu0 0.0
  %689 = vmatprep.subr.mxu0 0.0
  %690 = vmatpush2.msra.mxu0 0.0
  %691 = vmatprep.subr.mxu0 0.0
  %692 = vmatpush2.msra.mxu0 0.0
  %693 = vmatprep.subr.mxu0 0.0
  %694 = vmatpush2.msra.mxu0 0.0
  %695 = vmatprep.mubr.f32.mxu0 0.0
  %696 = vmatmul.mubr.f32.gmra.mxu0 %v629
  %v697 = vpop.f32.mrf.mxu0
  %v698 = vadd.f32 %v626, %v697
  %v699 = vpop.f32.mrf.mxu0
  %700 = vdwg.mxu0
  %v701 = vmul.f32 %v698, 1.442695
  %v702 = vpow.pop %v701
  %v703 = vmul.f32 %v18, %v702
  %v705 = vrot.slane %v698, 1
  %v707 = vadd.f32 %v703, %v705
  %708 = vst [vmem:[%s4] sm:$0x1] %v707
  %709 = vst [vmem:[%s4 + $0x1] sm:$0x1] %v362
  %v710 = vadd.f32 %v353, %v698
  %711 = vst [vmem:[%s4 + $0x2] sm:$0x1] %v710
  // Predicated region
  $region18: #{realnvp_forward.1} parent=0 // pred_check
    _
  $region19: #{realnvp_forward.1} parent=0 // pred_check_branch
    %713 = sbr.rel (0) target = $region21
  $region20: #{realnvp_forward.1} parent=0 // pred_region
    _
  $region21: #{realnvp_forward.1} parent=0 // pred_fallthru
    _
  // Predicated region
  $region22: #{realnvp_forward.1} parent=0 // pred_check
    _
  $region23: #{realnvp_forward.1} parent=0 // pred_check_branch
    %715 = sbr.rel (0) target = $region25
  $region24: #{realnvp_forward.1} parent=0 // pred_region
    _
  $region25: #{realnvp_forward.1} parent=0 // pred_fallthru
    _

</llo_original>
